<compile_context>
chip_gen: v7x
topology: tpu7x:2x2x1
jax: 0.10.0
libtpu: 0.0.40
codegen_flags: <defaults>
</compile_context>

<pallas_src>
import numpy as np
import jax
import jax.numpy as jnp
from jax.experimental import pallas as pl
from jax.experimental.pallas import tpu as pltpu


# ---------------------------------------------------------------------------
# Pallas kernel: whole (batch-folded) problem in one step, resident in VMEM.
#   x_ref   : (M, W*Cin)       lane-dense input, M = B*H (w outer, c inner)
#   w1_ref  : (W*Cin, W*Cp)    block-diagonal 1x1 conv1 weight (bf16)
#   w2_ref  : (3, W*Cp, W*Cp)  banded 3x3 conv2 weights, one band per
#                              vertical tap (h-1, h, h+1) (bf16)
#   w3_ref  : (W*Cp, W*Cout)   block-diagonal 1x1 conv3 weight (bf16)
#   mup_ref : (M, 1)           0 on rows whose h-1 neighbour is out of image
#   mdn_ref : (M, 1)           0 on rows whose h+1 neighbour is out of image
#   o_ref   : (M, W*Cout)      lane-dense output
# ---------------------------------------------------------------------------
def _bottleneck_kernel(x_ref, w1_ref, w2_ref, w3_ref, mup_ref, mdn_ref, o_ref):
    x = x_ref[...]                                   # (M, W*Cin) f32, residual

    # conv1 (1x1) + ReLU: one block-diagonal matmul (bf16 operands, f32 acc).
    h1 = jnp.maximum(
        jnp.dot(x.astype(jnp.bfloat16), w1_ref[...],
                preferred_element_type=jnp.float32),
        0.0)                                         # (M, W*Cp) f32

    # conv2 (3x3, pad=1) + ReLU.
    #   * vertical taps: static-shift roll along the (batch-folded) row axis,
    #     then a per-row mask zeroes rows whose neighbour lies outside the
    #     image (covers both the H zero-padding and image boundaries in M).
    #   * horizontal taps + W zero padding are folded into the banded weights.
    #   * three accumulating MXU dots (no lane-axis concatenate).
    h1_up = jnp.roll(h1, 1, axis=0) * mup_ref[...]   # row r <- h1[r-1]
    h1_dn = jnp.roll(h1, -1, axis=0) * mdn_ref[...]  # row r <- h1[r+1]
    h2 = jnp.dot(h1_up.astype(jnp.bfloat16), w2_ref[0],
                 preferred_element_type=jnp.float32)
    h2 = h2 + jnp.dot(h1.astype(jnp.bfloat16), w2_ref[1],
                      preferred_element_type=jnp.float32)
    h2 = h2 + jnp.dot(h1_dn.astype(jnp.bfloat16), w2_ref[2],
                      preferred_element_type=jnp.float32)
    h2 = jnp.maximum(h2, 0.0)                        # (M, W*Cp) f32

    # conv3 (1x1) + residual (no_relu=True -> no final ReLU), f32 add/store.
    out = jnp.dot(h2.astype(jnp.bfloat16), w3_ref[...],
                  preferred_element_type=jnp.float32) + x
    o_ref[...] = out.astype(o_ref.dtype)


# ---------------------------------------------------------------------------
# Weight packing (host-side glue): OIHW conv weights -> block matmul weights
# matching the (w outer, c inner) lane layout.  Cast to bf16 for the MXU.
# ---------------------------------------------------------------------------
def _pack_weights(w1, w2, w3, W):
    Cp = w1.shape[0]
    eye_w = jnp.eye(W, dtype=jnp.float32)

    # conv1 / conv3 (1x1): kron(I_W, M) with M[ci, co] = w[co, ci, 0, 0]
    bd1 = jnp.kron(eye_w, w1[:, :, 0, 0].T)                 # (W*Cin, W*Cp)
    bd3 = jnp.kron(eye_w, w3[:, :, 0, 0].T)                 # (W*Cp, W*Cout)

    # conv2 (3x3): per vertical tap kh, a banded block matrix applying the
    # three horizontal taps (and the width zero padding) in one matmul.
    bands = []
    for kh in range(3):
        band = jnp.zeros((W * Cp, W * Cp), jnp.float32)
        for kw, dw in enumerate((-1, 0, 1)):
            # S[w_in, w_out] = 1 iff w_out = w_in - dw
            shift = jnp.eye(W, k=-dw, dtype=jnp.float32)
            band = band + jnp.kron(shift, w2[:, :, kh, kw].T)
        bands.append(band)
    w2b = jnp.stack(bands, axis=0)                          # (3, W*Cp, W*Cp)

    return (bd1.astype(jnp.bfloat16),
            w2b.astype(jnp.bfloat16),
            bd3.astype(jnp.bfloat16))


# ---------------------------------------------------------------------------
# Wrapper: NCHW in / NCHW out (matches the PyTorch module interface).
# In a full network, keep activations lane-dense across blocks so the two
# transposes below (extra HBM round trips) disappear.
# ---------------------------------------------------------------------------
def bottleneck_pallas(x, w1, w2, w3):
    B, Cin, H, W = x.shape
    Cout = w3.shape[0]
    assert Cout == Cin, "downsample=None requires inplanes == planes * expansion"
    M = B * H

    # NCHW -> lane-dense (M, W*Cin): batch and H folded into the matmul M dim.
    x_ld = jnp.transpose(x, (0, 2, 3, 1)).reshape(M, W * Cin)

    bd1, w2b, bd3 = _pack_weights(w1, w2, w3, W)

    # Per-row masks for the vertical 3x3 taps (zero where the shifted
    # neighbour falls outside the image; images are stacked along M = B*H).
    r = jnp.arange(M)
    mask_up = ((r % H) != 0).astype(jnp.float32).reshape(M, 1)
    mask_dn = ((r % H) != (H - 1)).astype(jnp.float32).reshape(M, 1)

    # Single grid step: whole problem (~120 KiB) fits VMEM on every
    # generation; avoids per-step overhead on single-TC v5e/v6e.
    # (On v7x one could use grid=(2,) "parallel" with B/2 images per step.)
    out_ld = pl.pallas_call(
        _bottleneck_kernel,
        out_shape=jax.ShapeDtypeStruct((M, W * Cout), x.dtype),
        grid_spec=pltpu.PrefetchScalarGridSpec(
            num_scalar_prefetch=0,
            grid=(1,),
            in_specs=[
                pl.BlockSpec((M, W * Cin), lambda i: (0, 0)),   # x (lane-dense)
                pl.BlockSpec(bd1.shape, lambda i: (0, 0)),      # conv1 (bd)
                pl.BlockSpec(w2b.shape, lambda i: (0, 0, 0)),   # conv2 bands
                pl.BlockSpec(bd3.shape, lambda i: (0, 0)),      # conv3 (bd)
                pl.BlockSpec((M, 1), lambda i: (0, 0)),         # mask_up
                pl.BlockSpec((M, 1), lambda i: (0, 0)),         # mask_dn
            ],
            out_specs=pl.BlockSpec((M, W * Cout), lambda i: (0, 0)),
        ),
        compiler_params=pltpu.CompilerParams(
            dimension_semantics=("arbitrary",)),
    )(x_ld, bd1, w2b, bd3, mask_up, mask_dn)

    # lane-dense -> NCHW
    return jnp.transpose(out_ld.reshape(B, H, W, Cout), (0, 3, 1, 2))


# ---------------------------------------------------------------------------
# Pure-JAX reference (NCHW, f32 HIGHEST precision) for verification.
# ---------------------------------------------------------------------------
def bottleneck_reference(x, w1, w2, w3):
    dn = ('NCHW', 'OIHW', 'NCHW')
    hp = jax.lax.Precision.HIGHEST
    out = jax.lax.conv_general_dilated(
        x, w1, (1, 1), ((0, 0), (0, 0)), dimension_numbers=dn, precision=hp)
    out = jax.nn.relu(out)
    out = jax.lax.conv_general_dilated(
        out, w2, (1, 1), ((1, 1), (1, 1)), dimension_numbers=dn, precision=hp)
    out = jax.nn.relu(out)
    out = jax.lax.conv_general_dilated(
        out, w3, (1, 1), ((0, 0), (0, 0)), dimension_numbers=dn, precision=hp)
    return out + x          # no_relu=True -> return without final ReLU


if __name__ == "__main__":
    key = jax.random.PRNGKey(0)
    B, Cin, H, W = 2, 8, 16, 16        # inplanes = 8 -> lane width W*Cin = 128
    planes = Cin // 2                   # planes = 4, expansion = 2 -> out = 8 = Cin

    ks = jax.random.split(key, 4)
    x = jax.random.normal(ks[0], (B, Cin, H, W), jnp.float32)
    w1 = jax.random.normal(ks[1], (planes, Cin, 1, 1), jnp.float32) * 0.2        # conv1
    w2 = jax.random.normal(ks[2], (planes, planes, 3, 3), jnp.float32) * 0.2     # conv2
    w3 = jax.random.normal(ks[3], (2 * planes, planes, 1, 1), jnp.float32) * 0.2 # conv3

    out = bottleneck_pallas(x, w1, w2, w3)
    out = jax.block_until_ready(out)

    ref = bottleneck_reference(x, w1, w2, w3)
    # bf16 matmul operands (per the perf review) -> tolerance loosened vs. the
    # f32 HIGHEST-precision reference.
    np.testing.assert_allclose(np.asarray(out), np.asarray(ref), rtol=2e-2, atol=2e-2)
    print("KERNEL_OK")
</pallas_src>

<mosaic_0001>
module attributes {stable_mosaic.version = 11 : i64} {
  func.func @_bottleneck_kernel(%arg0: i32, %arg1: memref<32x128xf32, #tpu.memory_space<vmem>>, %arg2: memref<128x64xbf16, #tpu.memory_space<vmem>>, %arg3: memref<3x64x64xbf16, #tpu.memory_space<vmem>>, %arg4: memref<64x128xbf16, #tpu.memory_space<vmem>>, %arg5: memref<32x1xf32, #tpu.memory_space<vmem>>, %arg6: memref<32x1xf32, #tpu.memory_space<vmem>>, %arg7: memref<32x128xf32, #tpu.memory_space<vmem>>) attributes {dimension_semantics = [#tpu.dimension_semantics<arbitrary>], iteration_bounds = array<i64: 1>, scalar_prefetch = 0 : i64, scratch_operands = 0 : i64, tpu.core_type = #tpu.core_type<tc>, window_params = [{pipeline_mode = #tpu.pipeline_mode<synchronous>, transform_indices = @transform_0, window_bounds = array<i64: 32, 128>}, {pipeline_mode = #tpu.pipeline_mode<synchronous>, transform_indices = @transform_1, window_bounds = array<i64: 128, 64>}, {pipeline_mode = #tpu.pipeline_mode<synchronous>, transform_indices = @transform_2, window_bounds = array<i64: 3, 64, 64>}, {pipeline_mode = #tpu.pipeline_mode<synchronous>, transform_indices = @transform_3, window_bounds = array<i64: 64, 128>}, {pipeline_mode = #tpu.pipeline_mode<synchronous>, transform_indices = @transform_4, window_bounds = array<i64: 32, 1>}, {pipeline_mode = #tpu.pipeline_mode<synchronous>, transform_indices = @transform_5, window_bounds = array<i64: 32, 1>}, {pipeline_mode = #tpu.pipeline_mode<synchronous>, transform_indices = @transform_6, window_bounds = array<i64: 32, 128>}]} {
    %c0 = arith.constant 0 : index
    %c0_0 = arith.constant 0 : index
    %0 = vector.load %arg1[%c0, %c0_0] : memref<32x128xf32, #tpu.memory_space<vmem>>, vector<32x128xf32>
    %1 = arith.truncf %0 : vector<32x128xf32> to vector<32x128xbf16>
    %c0_1 = arith.constant 0 : index
    %c0_2 = arith.constant 0 : index
    %2 = vector.load %arg2[%c0_1, %c0_2] : memref<128x64xbf16, #tpu.memory_space<vmem>>, vector<128x64xbf16>
    %cst = arith.constant dense<0.000000e+00> : vector<32x64xf32>
    %3 = tpu.matmul %1, %2, %cst {dimension_numbers = #tpu.dot_dimension_numbers<[1], [0], [0], [1], [0, 0, 1, 1], [], []>} : vector<32x128xbf16>, vector<128x64xbf16>, vector<32x64xf32> -> vector<32x64xf32>
    %cst_3 = arith.constant 0.000000e+00 : f32
    %4 = vector.broadcast %cst_3 : f32 to vector<32x64xf32>
    %5 = arith.maximumf %3, %4 : vector<32x64xf32>
    %6 = vector.extract_strided_slice %5 {offsets = [31, 0], sizes = [1, 64], strides = [1, 1]} : vector<32x64xf32> to vector<1x64xf32>
    %7 = vector.extract_strided_slice %5 {offsets = [0, 0], sizes = [31, 64], strides = [1, 1]} : vector<32x64xf32> to vector<31x64xf32>
    %8 = tpu.concatenate %6, %7 in 0 : vector<1x64xf32>, vector<31x64xf32> -> vector<32x64xf32>
    %c0_4 = arith.constant 0 : index
    %c0_5 = arith.constant 0 : index
    %9 = vector.load %arg5[%c0_4, %c0_5] : memref<32x1xf32, #tpu.memory_space<vmem>>, vector<32x1xf32>
    %10 = vector.broadcast %9 : vector<32x1xf32> to vector<32x64xf32>
    %11 = arith.mulf %8, %10 : vector<32x64xf32>
    %12 = vector.extract_strided_slice %5 {offsets = [1, 0], sizes = [31, 64], strides = [1, 1]} : vector<32x64xf32> to vector<31x64xf32>
    %13 = vector.extract_strided_slice %5 {offsets = [0, 0], sizes = [1, 64], strides = [1, 1]} : vector<32x64xf32> to vector<1x64xf32>
    %14 = tpu.concatenate %12, %13 in 0 : vector<31x64xf32>, vector<1x64xf32> -> vector<32x64xf32>
    %c0_6 = arith.constant 0 : index
    %c0_7 = arith.constant 0 : index
    %15 = vector.load %arg6[%c0_6, %c0_7] : memref<32x1xf32, #tpu.memory_space<vmem>>, vector<32x1xf32>
    %16 = vector.broadcast %15 : vector<32x1xf32> to vector<32x64xf32>
    %17 = arith.mulf %14, %16 : vector<32x64xf32>
    %18 = arith.truncf %11 : vector<32x64xf32> to vector<32x64xbf16>
    %c0_8 = arith.constant 0 : index
    %c0_9 = arith.constant 0 : index
    %c0_10 = arith.constant 0 : index
    %19 = vector.load %arg3[%c0_8, %c0_9, %c0_10] : memref<3x64x64xbf16, #tpu.memory_space<vmem>>, vector<1x64x64xbf16>
    %20 = vector.shape_cast %19 : vector<1x64x64xbf16> to vector<64x64xbf16>
    %cst_11 = arith.constant dense<0.000000e+00> : vector<32x64xf32>
    %21 = tpu.matmul %18, %20, %cst_11 {dimension_numbers = #tpu.dot_dimension_numbers<[1], [0], [0], [1], [0, 0, 1, 1], [], []>} : vector<32x64xbf16>, vector<64x64xbf16>, vector<32x64xf32> -> vector<32x64xf32>
    %22 = arith.truncf %5 : vector<32x64xf32> to vector<32x64xbf16>
    %c1 = arith.constant 1 : index
    %c0_12 = arith.constant 0 : index
    %c0_13 = arith.constant 0 : index
    %23 = vector.load %arg3[%c1, %c0_12, %c0_13] : memref<3x64x64xbf16, #tpu.memory_space<vmem>>, vector<1x64x64xbf16>
    %24 = vector.shape_cast %23 : vector<1x64x64xbf16> to vector<64x64xbf16>
    %cst_14 = arith.constant dense<0.000000e+00> : vector<32x64xf32>
    %25 = tpu.matmul %22, %24, %cst_14 {dimension_numbers = #tpu.dot_dimension_numbers<[1], [0], [0], [1], [0, 0, 1, 1], [], []>} : vector<32x64xbf16>, vector<64x64xbf16>, vector<32x64xf32> -> vector<32x64xf32>
    %26 = arith.addf %21, %25 : vector<32x64xf32>
    %27 = arith.truncf %17 : vector<32x64xf32> to vector<32x64xbf16>
    %c2 = arith.constant 2 : index
    %c0_15 = arith.constant 0 : index
    %c0_16 = arith.constant 0 : index
    %28 = vector.load %arg3[%c2, %c0_15, %c0_16] : memref<3x64x64xbf16, #tpu.memory_space<vmem>>, vector<1x64x64xbf16>
    %29 = vector.shape_cast %28 : vector<1x64x64xbf16> to vector<64x64xbf16>
    %cst_17 = arith.constant dense<0.000000e+00> : vector<32x64xf32>
    %30 = tpu.matmul %27, %29, %cst_17 {dimension_numbers = #tpu.dot_dimension_numbers<[1], [0], [0], [1], [0, 0, 1, 1], [], []>} : vector<32x64xbf16>, vector<64x64xbf16>, vector<32x64xf32> -> vector<32x64xf32>
    %31 = arith.addf %26, %30 : vector<32x64xf32>
    %cst_18 = arith.constant 0.000000e+00 : f32
    %32 = vector.broadcast %cst_18 : f32 to vector<32x64xf32>
    %33 = arith.maximumf %31, %32 : vector<32x64xf32>
    %34 = arith.truncf %33 : vector<32x64xf32> to vector<32x64xbf16>
    %c0_19 = arith.constant 0 : index
    %c0_20 = arith.constant 0 : index
    %35 = vector.load %arg4[%c0_19, %c0_20] : memref<64x128xbf16, #tpu.memory_space<vmem>>, vector<64x128xbf16>
    %cst_21 = arith.constant dense<0.000000e+00> : vector<32x128xf32>
    %36 = tpu.matmul %34, %35, %cst_21 {dimension_numbers = #tpu.dot_dimension_numbers<[1], [0], [0], [1], [0, 0, 1, 1], [], []>} : vector<32x64xbf16>, vector<64x128xbf16>, vector<32x128xf32> -> vector<32x128xf32>
    %37 = arith.addf %36, %0 : vector<32x128xf32>
    %c0_22 = arith.constant 0 : index
    %c0_23 = arith.constant 0 : index
    %38 = vector.load %arg7[%c0_22, %c0_23] : memref<32x128xf32, #tpu.memory_space<vmem>>, vector<32x128xf32>
    tpu.vector_store %arg7[%c0_22, %c0_23], %37 {strides = array<i32>} : memref<32x128xf32, #tpu.memory_space<vmem>>, vector<32x128xf32>,
    return
  }
  func.func @transform_0(%arg0: i32) -> (i32, i32) {
    %c0_i32 = arith.constant 0 : i32
    %c0_i32_0 = arith.constant 0 : i32
    %c0_i32_1 = arith.constant 0 : i32
    return %c0_i32, %c0_i32_0 : i32, i32
  }
  func.func @transform_1(%arg0: i32) -> (i32, i32) {
    %c0_i32 = arith.constant 0 : i32
    %c0_i32_0 = arith.constant 0 : i32
    %c0_i32_1 = arith.constant 0 : i32
    return %c0_i32, %c0_i32_0 : i32, i32
  }
  func.func @transform_2(%arg0: i32) -> (i32, i32, i32) {
    %c0_i32 = arith.constant 0 : i32
    %c0_i32_0 = arith.constant 0 : i32
    %c0_i32_1 = arith.constant 0 : i32
    %c0_i32_2 = arith.constant 0 : i32
    return %c0_i32, %c0_i32_0, %c0_i32_1 : i32, i32, i32
  }
  func.func @transform_3(%arg0: i32) -> (i32, i32) {
    %c0_i32 = arith.constant 0 : i32
    %c0_i32_0 = arith.constant 0 : i32
    %c0_i32_1 = arith.constant 0 : i32
    return %c0_i32, %c0_i32_0 : i32, i32
  }
  func.func @transform_4(%arg0: i32) -> (i32, i32) {
    %c0_i32 = arith.constant 0 : i32
    %c0_i32_0 = arith.constant 0 : i32
    %c0_i32_1 = arith.constant 0 : i32
    return %c0_i32, %c0_i32_0 : i32, i32
  }
  func.func @transform_5(%arg0: i32) -> (i32, i32) {
    %c0_i32 = arith.constant 0 : i32
    %c0_i32_0 = arith.constant 0 : i32
    %c0_i32_1 = arith.constant 0 : i32
    return %c0_i32, %c0_i32_0 : i32, i32
  }
  func.func @transform_6(%arg0: i32) -> (i32, i32) {
    %c0_i32 = arith.constant 0 : i32
    %c0_i32_0 = arith.constant 0 : i32
    %c0_i32_1 = arith.constant 0 : i32
    return %c0_i32, %c0_i32_0 : i32, i32
  }
}

</mosaic_0001>

<llo_original>
// kernel: tpu_custom_call.1
$region0: #{tpu_custom_call.1}
  #allocation0 [shape = 'u32[]', space=smem, size = 0x4, offset = 0x4, fixed_abs, tag = 'smem constant byte address 0x4 - core index']
  #allocation1 [shape = 'u32[144,128]{1,0:T(1,128)}', space=vmem, size = 0x12000, scoped, tag = 'internal scratch']
  %s0 = inlined_call_operand.vmem [shape: f32[32,128], index: 0, kind: input, shape index: {}]
  %s1 = inlined_call_operand.vmem [shape: bf16[128,64], index: 1, kind: input, shape index: {}]
  %s2 = inlined_call_operand.vmem [shape: bf16[3,64,64], index: 2, kind: input, shape index: {}]
  %s3 = inlined_call_operand.vmem [shape: bf16[64,128], index: 3, kind: input, shape index: {}]
  %s4 = inlined_call_operand.vmem [shape: f32[32,1], index: 4, kind: input, shape index: {}]
  %s5 = inlined_call_operand.vmem [shape: f32[32,1], index: 5, kind: input, shape index: {}]
  %s6 = inlined_call_operand.hbm [shape: f32[32,128], index: 6, kind: output, shape index: {}]
  %s7 = sld [smem:[#allocation0]]
  $region34: #{tpu_custom_call.1} parent=0
    _
  %s9 = ssub.s32 1, %s7
  %s10 = scalar_select 0, %s9, %s7
  $region1: #{tpu_custom_call.1} parent=0
    #allocation2 [shape = 'u8[16384]{0}', space=vmem, size = 0x4000, scoped, tag = 'output window, operand 0, single buffered']
    #allocation3 [shape = 's32[1]{0}', space=sflag, size = 0x4, scoped, tag = 'scoped memory for tpu_custom_call.1']
    %11 = vsyncpa [#allocation3], 0
    // Predicated region
    $region2: #{tpu_custom_call.1} parent=1 // pred_check
      _
    $region3: #{tpu_custom_call.1} parent=1 // pred_check_branch
      %13 = sbr.rel (0) target = $region5
    $region4: #{tpu_custom_call.1} parent=1 // pred_region
      _
    $region5: #{tpu_custom_call.1} parent=1 // pred_fallthru
      _
    // Predicated region
    $region6: #{tpu_custom_call.1} parent=1 // pred_check
      _
    $region7: #{tpu_custom_call.1} parent=1 // pred_check_branch
      %15 = sbr.rel (0) target = $region9
    $region8: #{tpu_custom_call.1} parent=1 // pred_region
      _
    $region9: #{tpu_custom_call.1} parent=1 // pred_fallthru
      _
    // Predicated region
    $region10: #{tpu_custom_call.1} parent=1 // pred_check
      _
    $region11: #{tpu_custom_call.1} parent=1 // pred_check_branch
      %17 = sbr.rel (0) target = $region13
    $region12: #{tpu_custom_call.1} parent=1 // pred_region
      _
    $region13: #{tpu_custom_call.1} parent=1 // pred_fallthru
      _
    // Predicated region
    $region14: #{tpu_custom_call.1} parent=1 // pred_check
      _
    $region15: #{tpu_custom_call.1} parent=1 // pred_check_branch
      %19 = sbr.rel (0) target = $region17
    $region16: #{tpu_custom_call.1} parent=1 // pred_region
      _
    $region17: #{tpu_custom_call.1} parent=1 // pred_fallthru
      _
    // Predicated region
    $region18: #{tpu_custom_call.1} parent=1 // pred_check
      _
    $region19: #{tpu_custom_call.1} parent=1 // pred_check_branch
      %21 = sbr.rel (0) target = $region21
    $region20: #{tpu_custom_call.1} parent=1 // pred_region
      _
    $region21: #{tpu_custom_call.1} parent=1 // pred_fallthru
      _
    // Predicated region
    $region22: #{tpu_custom_call.1} parent=1 // pred_check
      _
    $region23: #{tpu_custom_call.1} parent=1 // pred_check_branch
      %23 = sbr.rel (0) target = $region25
    $region24: #{tpu_custom_call.1} parent=1 // pred_region
      _
    $region25: #{tpu_custom_call.1} parent=1 // pred_fallthru
      _
    %v25 = vld [vmem:[%s0] sm:$0xff]
    %v26 = vld [vmem:[%s0 + $0x8] sm:$0xff]
    %v27 = vld [vmem:[%s0 + $0x10] sm:$0xff]
    %v28 = vld [vmem:[%s0 + $0x18] sm:$0xff]
    %v29 = vpack.c.bf16 %v26, %v25
    %v30 = vpack.c.bf16 %v28, %v27
    %v31 = vld [vmem:[%s1] sm:$0xf]
    %v32 = vld [vmem:[%s1 + $0x4] sm:$0xf]
    %v33 = vld [vmem:[%s1 + $0x8] sm:$0xf]
    %v34 = vld [vmem:[%s1 + $0xc] sm:$0xf]
    %v35 = vld [vmem:[%s1 + $0x10] sm:$0xf]
    %v36 = vld [vmem:[%s1 + $0x14] sm:$0xf]
    %v37 = vld [vmem:[%s1 + $0x18] sm:$0xf]
    %v38 = vld [vmem:[%s1 + $0x1c] sm:$0xf]
    %v39 = vld [vmem:[%s1 + $0x20] sm:$0xf]
    %v40 = vld [vmem:[%s1 + $0x24] sm:$0xf]
    %v41 = vld [vmem:[%s1 + $0x28] sm:$0xf]
    %v42 = vld [vmem:[%s1 + $0x2c] sm:$0xf]
    %v43 = vld [vmem:[%s1 + $0x30] sm:$0xf]
    %v44 = vld [vmem:[%s1 + $0x34] sm:$0xf]
    %v45 = vld [vmem:[%s1 + $0x38] sm:$0xf]
    %v46 = vld [vmem:[%s1 + $0x3c] sm:$0xf]
    %v63 = vunpack.c.l.b16 %v31
    %v64 = vunpack.c.l.b16 %v32
    %v65 = vunpack.c.l.b16 %v33
    %v66 = vunpack.c.l.b16 %v34
    %v67 = vunpack.c.l.b16 %v35
    %v68 = vunpack.c.l.b16 %v36
    %v69 = vunpack.c.l.b16 %v37
    %v70 = vunpack.c.l.b16 %v38
    %v71 = vunpack.c.l.b16 %v39
    %v72 = vunpack.c.l.b16 %v40
    %v73 = vunpack.c.l.b16 %v41
    %v74 = vunpack.c.l.b16 %v42
    %v75 = vunpack.c.l.b16 %v43
    %v76 = vunpack.c.l.b16 %v44
    %v77 = vunpack.c.l.b16 %v45
    %v78 = vunpack.c.l.b16 %v46
    %v79 = vpack.c.b16 %v64, %v63
    %v80 = vpack.c.b16 %v66, %v65
    %v81 = vpack.c.b16 %v68, %v67
    %v82 = vpack.c.b16 %v70, %v69
    %v83 = vpack.c.b16 %v72, %v71
    %v84 = vpack.c.b16 %v74, %v73
    %v85 = vpack.c.b16 %v76, %v75
    %v86 = vpack.c.b16 %v78, %v77
    %95 = vmatprep.subr.bf16.mxu0 0
    %96 = vmatpush1.bf16.msra.mxu0 %v79
    %97 = vmatprep.subr.bf16.mxu0 0
    %98 = vmatpush1.bf16.msra.mxu0 %v80
    %99 = vmatprep.subr.bf16.mxu0 0
    %100 = vmatpush1.bf16.msra.mxu0 %v81
    %101 = vmatprep.subr.bf16.mxu0 0
    %102 = vmatpush1.bf16.msra.mxu0 %v82
    %103 = vmatprep.subr.bf16.mxu0 0
    %104 = vmatpush1.bf16.msra.mxu0 %v83
    %105 = vmatprep.subr.bf16.mxu0 0
    %106 = vmatpush1.bf16.msra.mxu0 %v84
    %107 = vmatprep.subr.bf16.mxu0 0
    %108 = vmatpush1.bf16.msra.mxu0 %v85
    %109 = vmatprep.subr.bf16.mxu0 0
    %110 = vmatpush1.bf16.msra.mxu0 %v86
    %111 = vmatprep.subr.bf16.mxu0 0
    %112 = vmatpush1.bf16.msra.mxu0 0
    %113 = vmatprep.subr.bf16.mxu0 0
    %114 = vmatpush1.bf16.msra.mxu0 0
    %115 = vmatprep.subr.bf16.mxu0 0
    %116 = vmatpush1.bf16.msra.mxu0 0
    %117 = vmatprep.subr.bf16.mxu0 0
    %118 = vmatpush1.bf16.msra.mxu0 0
    %119 = vmatprep.subr.bf16.mxu0 0
    %120 = vmatpush1.bf16.msra.mxu0 0
    %121 = vmatprep.subr.bf16.mxu0 0
    %122 = vmatpush1.bf16.msra.mxu0 0
    %123 = vmatprep.subr.bf16.mxu0 0
    %124 = vmatpush1.bf16.msra.mxu0 0
    %125 = vmatprep.subr.bf16.mxu0 0
    %126 = vmatpush1.bf16.msra.mxu0 0
    %127 = vmatprep.mubr.bf16.mxu0 0
    %128 = vmatmul.mubr.bf16.gmra.mrb[0].mxu0 %v29
    %v129 = vpop.f32.mrb[0].mxu0
    %v130 = vadd.f32 0.0, %v129
    %v131 = vpop.f32.mrb[0].mxu0
    %v132 = vpop.f32.mrb[0].mxu0
    %v133 = vadd.f32 0.0, %v132
    %v134 = vpop.f32.mrb[0].mxu0
    %135 = vmatprep.mubr.bf16.mxu0 0
    %136 = vmatmul.mubr.bf16.gmra.mrb[0].mxu0 %v30
    %v137 = vpop.f32.mrb[0].mxu0
    %v138 = vadd.f32 0.0, %v137
    %v139 = vpop.f32.mrb[0].mxu0
    %v140 = vpop.f32.mrb[0].mxu0
    %v141 = vadd.f32 0.0, %v140
    %v142 = vpop.f32.mrb[0].mxu0
    %143 = vdwg.mxu0
    %v144 = vmax.f32 %v130, 0.0
    %v145 = vmax.f32 %v133, 0.0
    %v146 = vmax.f32 %v138, 0.0
    %v147 = vmax.f32 %v141, 0.0
    %v149 = vrot.slane %v147, 7
    %vm154 = vcmask 1040384
    %v155 = vrot.slane %v144, 7
    %v156 = vrot.slane %v145, 7
    %v157 = vsel %vm154, %v155, %v156
    %v158 = vrot.slane %v146, 7
    %v159 = vsel %vm154, %v156, %v158
    %v160 = vsel %vm154, %v158, %v149
    %v165 = vsel %vm154, %v149, %v155
    %v166 = vld [vmem:[%s4] sm:$0xff]
    %v167 = vld [vmem:[%s4 + $0x8] sm:$0xff]
    %v168 = vld [vmem:[%s4 + $0x10] sm:$0xff]
    %v169 = vld [vmem:[%s4 + $0x18] sm:$0xff]
    %171 = vset.pattern.permute.xlu0 0
    %172 = vperm.xlu0 %171, %v166
    %v173 = vpop.permute.xlu0 %172
    %176 = vset.pattern.permute.xlu0 0
    %177 = vperm.xlu0 %176, %v167
    %v178 = vpop.permute.xlu0 %177
    %181 = vset.pattern.permute.xlu0 0
    %182 = vperm.xlu0 %181, %v168
    %v183 = vpop.permute.xlu0 %182
    %186 = vset.pattern.permute.xlu0 0
    %187 = vperm.xlu0 %186, %v169
    %v188 = vpop.permute.xlu0 %187
    %v190 = vmul.f32 %v165, %v173
    %v191 = vmul.f32 %v157, %v178
    %v192 = vmul.f32 %v159, %v183
    %v193 = vmul.f32 %v160, %v188
    %vm194 = vcmask 1046528
    %v195 = vrot.slane %v144, 1
    %v196 = vrot.slane %v145, 1
    %v197 = vsel %vm194, %v195, %v196
    %v198 = vrot.slane %v146, 1
    %v199 = vsel %vm194, %v196, %v198
    %v200 = vrot.slane %v147, 1
    %v201 = vsel %vm194, %v198, %v200
    %v207 = vsel %vm194, %v200, %v195
    %v208 = vld [vmem:[%s5] sm:$0xff]
    %v209 = vld [vmem:[%s5 + $0x8] sm:$0xff]
    %v210 = vld [vmem:[%s5 + $0x10] sm:$0xff]
    %v211 = vld [vmem:[%s5 + $0x18] sm:$0xff]
    %213 = vset.pattern.permute.xlu0 0
    %214 = vperm.xlu0 %213, %v208
    %v215 = vpop.permute.xlu0 %214
    %218 = vset.pattern.permute.xlu0 0
    %219 = vperm.xlu0 %218, %v209
    %v220 = vpop.permute.xlu0 %219
    %223 = vset.pattern.permute.xlu0 0
    %224 = vperm.xlu0 %223, %v210
    %v225 = vpop.permute.xlu0 %224
    %228 = vset.pattern.permute.xlu0 0
    %229 = vperm.xlu0 %228, %v211
    %v230 = vpop.permute.xlu0 %229
    %v232 = vmul.f32 %v197, %v215
    %v233 = vmul.f32 %v199, %v220
    %v234 = vmul.f32 %v201, %v225
    %v235 = vmul.f32 %v207, %v230
    %v236 = vpack.c.bf16 %v191, %v190
    %v237 = vpack.c.bf16 %v193, %v192
    %v238 = vld [vmem:[%s2] sm:$0xf]
    %v239 = vld [vmem:[%s2 + $0x4] sm:$0xf]
    %v240 = vld [vmem:[%s2 + $0x8] sm:$0xf]
    %v241 = vld [vmem:[%s2 + $0xc] sm:$0xf]
    %v242 = vld [vmem:[%s2 + $0x10] sm:$0xf]
    %v243 = vld [vmem:[%s2 + $0x14] sm:$0xf]
    %v244 = vld [vmem:[%s2 + $0x18] sm:$0xf]
    %v245 = vld [vmem:[%s2 + $0x1c] sm:$0xf]
    %v246 = vpack.c.bf16 %v145, %v144
    %v247 = vpack.c.bf16 %v147, %v146
    %s248 = scalar_lea.vmem %s2, 32
    %v249 = vld [vmem:[%s248] sm:$0xf]
    %v250 = vld [vmem:[%s248 + $0x4] sm:$0xf]
    %v251 = vld [vmem:[%s248 + $0x8] sm:$0xf]
    %v252 = vld [vmem:[%s248 + $0xc] sm:$0xf]
    %v253 = vld [vmem:[%s248 + $0x10] sm:$0xf]
    %v254 = vld [vmem:[%s248 + $0x14] sm:$0xf]
    %v255 = vld [vmem:[%s248 + $0x18] sm:$0xf]
    %v256 = vld [vmem:[%s248 + $0x1c] sm:$0xf]
    %v265 = vunpack.c.l.b16 %v249
    %v266 = vunpack.c.l.b16 %v250
    %v267 = vunpack.c.l.b16 %v251
    %v268 = vunpack.c.l.b16 %v252
    %v269 = vunpack.c.l.b16 %v253
    %v270 = vunpack.c.l.b16 %v254
    %v271 = vunpack.c.l.b16 %v255
    %v272 = vunpack.c.l.b16 %v256
    %v273 = vpack.c.b16 %v266, %v265
    %v274 = vpack.c.b16 %v268, %v267
    %v275 = vpack.c.b16 %v270, %v269
    %v276 = vpack.c.b16 %v272, %v271
    %vm281 = vcmask 523264
    %v283 = vsel %vm281, %v246, 0
    %v286 = vsel %vm281, %v247, 0
    %288 = vmatprep.subr.bf16.mxu0 0
    %289 = vmatpush1.bf16.msra.mxu0 %v273
    %290 = vmatprep.subr.bf16.mxu0 0
    %291 = vmatpush1.bf16.msra.mxu0 %v274
    %292 = vmatprep.subr.bf16.mxu0 0
    %293 = vmatpush1.bf16.msra.mxu0 %v275
    %294 = vmatprep.subr.bf16.mxu0 0
    %295 = vmatpush1.bf16.msra.mxu0 %v276
    %296 = vmatprep.subr.bf16.mxu0 0
    %297 = vmatpush1.bf16.msra.mxu0 0
    %298 = vmatprep.subr.bf16.mxu0 0
    %299 = vmatpush1.bf16.msra.mxu0 0
    %300 = vmatprep.subr.bf16.mxu0 0
    %301 = vmatpush1.bf16.msra.mxu0 0
    %302 = vmatprep.subr.bf16.mxu0 0
    %303 = vmatpush1.bf16.msra.mxu0 0
    %304 = vmatprep.subr.bf16.mxu0 0
    %305 = vmatpush1.bf16.msra.mxu0 0
    %306 = vmatprep.subr.bf16.mxu0 0
    %307 = vmatpush1.bf16.msra.mxu0 0
    %308 = vmatprep.subr.bf16.mxu0 0
    %309 = vmatpush1.bf16.msra.mxu0 0
    %310 = vmatprep.subr.bf16.mxu0 0
    %311 = vmatpush1.bf16.msra.mxu0 0
    %312 = vmatprep.subr.bf16.mxu0 0
    %313 = vmatpush1.bf16.msra.mxu0 0
    %314 = vmatprep.subr.bf16.mxu0 0
    %315 = vmatpush1.bf16.msra.mxu0 0
    %316 = vmatprep.subr.bf16.mxu0 0
    %317 = vmatpush1.bf16.msra.mxu0 0
    %318 = vmatprep.subr.bf16.mxu0 0
    %319 = vmatpush1.bf16.msra.mxu0 0
    %320 = vmatprep.mubr.bf16.mxu0 0
    %321 = vmatmul.mubr.bf16.gmra.mrb[0].mxu0 %v283
    %v322 = vpop.f32.mrb[0].mxu0
    %v323 = vadd.f32 0.0, %v322
    %v324 = vpop.f32.mrb[0].mxu0
    %v325 = vpop.f32.mrb[0].mxu0
    %v326 = vadd.f32 0.0, %v325
    %v327 = vpop.f32.mrb[0].mxu0
    %328 = vmatprep.mubr.bf16.mxu0 0
    %329 = vmatmul.mubr.bf16.gmra.mrb[0].mxu0 %v286
    %v330 = vpop.f32.mrb[0].mxu0
    %v331 = vadd.f32 0.0, %v330
    %v332 = vpop.f32.mrb[0].mxu0
    %v333 = vpop.f32.mrb[0].mxu0
    %v334 = vadd.f32 0.0, %v333
    %v335 = vpop.f32.mrb[0].mxu0
    %336 = vdwg.mxu0
    %v345 = vunpack.c.l.b16 %v238
    %v346 = vunpack.c.l.b16 %v239
    %v347 = vunpack.c.l.b16 %v240
    %v348 = vunpack.c.l.b16 %v241
    %v349 = vunpack.c.l.b16 %v242
    %v350 = vunpack.c.l.b16 %v243
    %v351 = vunpack.c.l.b16 %v244
    %v352 = vunpack.c.l.b16 %v245
    %v353 = vpack.c.b16 %v346, %v345
    %v354 = vpack.c.b16 %v348, %v347
    %v355 = vpack.c.b16 %v350, %v349
    %v356 = vpack.c.b16 %v352, %v351
    %v362 = vsel %vm281, %v236, 0
    %v365 = vsel %vm281, %v237, 0
    %367 = vmatprep.subr.bf16.mxu0 0
    %368 = vmatpush1.bf16.msra.mxu0 %v353
    %369 = vmatprep.subr.bf16.mxu0 0
    %370 = vmatpush1.bf16.msra.mxu0 %v354
    %371 = vmatprep.subr.bf16.mxu0 0
    %372 = vmatpush1.bf16.msra.mxu0 %v355
    %373 = vmatprep.subr.bf16.mxu0 0
    %374 = vmatpush1.bf16.msra.mxu0 %v356
    %375 = vmatprep.subr.bf16.mxu0 0
    %376 = vmatpush1.bf16.msra.mxu0 0
    %377 = vmatprep.subr.bf16.mxu0 0
    %378 = vmatpush1.bf16.msra.mxu0 0
    %379 = vmatprep.subr.bf16.mxu0 0
    %380 = vmatpush1.bf16.msra.mxu0 0
    %381 = vmatprep.subr.bf16.mxu0 0
    %382 = vmatpush1.bf16.msra.mxu0 0
    %383 = vmatprep.subr.bf16.mxu0 0
    %384 = vmatpush1.bf16.msra.mxu0 0
    %385 = vmatprep.subr.bf16.mxu0 0
    %386 = vmatpush1.bf16.msra.mxu0 0
    %387 = vmatprep.subr.bf16.mxu0 0
    %388 = vmatpush1.bf16.msra.mxu0 0
    %389 = vmatprep.subr.bf16.mxu0 0
    %390 = vmatpush1.bf16.msra.mxu0 0
    %391 = vmatprep.subr.bf16.mxu0 0
    %392 = vmatpush1.bf16.msra.mxu0 0
    %393 = vmatprep.subr.bf16.mxu0 0
    %394 = vmatpush1.bf16.msra.mxu0 0
    %395 = vmatprep.subr.bf16.mxu0 0
    %396 = vmatpush1.bf16.msra.mxu0 0
    %397 = vmatprep.subr.bf16.mxu0 0
    %398 = vmatpush1.bf16.msra.mxu0 0
    %399 = vmatprep.mubr.bf16.mxu0 0
    %400 = vmatmul.mubr.bf16.gmra.mrb[0].mxu0 %v362
    %v401 = vpop.f32.mrb[0].mxu0
    %v402 = vadd.f32 %v323, %v401
    %v403 = vpop.f32.mrb[0].mxu0
    %v404 = vpop.f32.mrb[0].mxu0
    %v405 = vadd.f32 %v326, %v404
    %v406 = vpop.f32.mrb[0].mxu0
    %407 = vmatprep.mubr.bf16.mxu0 0
    %408 = vmatmul.mubr.bf16.gmra.mrb[0].mxu0 %v365
    %v409 = vpop.f32.mrb[0].mxu0
    %v410 = vadd.f32 %v331, %v409
    %v411 = vpop.f32.mrb[0].mxu0
    %v412 = vpop.f32.mrb[0].mxu0
    %v413 = vadd.f32 %v334, %v412
    %v414 = vpop.f32.mrb[0].mxu0
    %415 = vdwg.mxu0
    %v416 = vpack.c.bf16 %v233, %v232
    %v417 = vpack.c.bf16 %v235, %v234
    %s418 = scalar_lea.vmem %s2, 64
    %v419 = vld [vmem:[%s418] sm:$0xf]
    %v420 = vld [vmem:[%s418 + $0x4] sm:$0xf]
    %v421 = vld [vmem:[%s418 + $0x8] sm:$0xf]
    %v422 = vld [vmem:[%s418 + $0xc] sm:$0xf]
    %v423 = vld [vmem:[%s418 + $0x10] sm:$0xf]
    %v424 = vld [vmem:[%s418 + $0x14] sm:$0xf]
    %v425 = vld [vmem:[%s418 + $0x18] sm:$0xf]
    %v426 = vld [vmem:[%s418 + $0x1c] sm:$0xf]
    %v435 = vunpack.c.l.b16 %v419
    %v436 = vunpack.c.l.b16 %v420
    %v437 = vunpack.c.l.b16 %v421
    %v438 = vunpack.c.l.b16 %v422
    %v439 = vunpack.c.l.b16 %v423
    %v440 = vunpack.c.l.b16 %v424
    %v441 = vunpack.c.l.b16 %v425
    %v442 = vunpack.c.l.b16 %v426
    %v443 = vpack.c.b16 %v436, %v435
    %v444 = vpack.c.b16 %v438, %v437
    %v445 = vpack.c.b16 %v440, %v439
    %v446 = vpack.c.b16 %v442, %v441
    %v452 = vsel %vm281, %v416, 0
    %v455 = vsel %vm281, %v417, 0
    %457 = vmatprep.subr.bf16.mxu0 0
    %458 = vmatpush1.bf16.msra.mxu0 %v443
    %459 = vmatprep.subr.bf16.mxu0 0
    %460 = vmatpush1.bf16.msra.mxu0 %v444
    %461 = vmatprep.subr.bf16.mxu0 0
    %462 = vmatpush1.bf16.msra.mxu0 %v445
    %463 = vmatprep.subr.bf16.mxu0 0
    %464 = vmatpush1.bf16.msra.mxu0 %v446
    %465 = vmatprep.subr.bf16.mxu0 0
    %466 = vmatpush1.bf16.msra.mxu0 0
    %467 = vmatprep.subr.bf16.mxu0 0
    %468 = vmatpush1.bf16.msra.mxu0 0
    %469 = vmatprep.subr.bf16.mxu0 0
    %470 = vmatpush1.bf16.msra.mxu0 0
    %471 = vmatprep.subr.bf16.mxu0 0
    %472 = vmatpush1.bf16.msra.mxu0 0
    %473 = vmatprep.subr.bf16.mxu0 0
    %474 = vmatpush1.bf16.msra.mxu0 0
    %475 = vmatprep.subr.bf16.mxu0 0
    %476 = vmatpush1.bf16.msra.mxu0 0
    %477 = vmatprep.subr.bf16.mxu0 0
    %478 = vmatpush1.bf16.msra.mxu0 0
    %479 = vmatprep.subr.bf16.mxu0 0
    %480 = vmatpush1.bf16.msra.mxu0 0
    %481 = vmatprep.subr.bf16.mxu0 0
    %482 = vmatpush1.bf16.msra.mxu0 0
    %483 = vmatprep.subr.bf16.mxu0 0
    %484 = vmatpush1.bf16.msra.mxu0 0
    %485 = vmatprep.subr.bf16.mxu0 0
    %486 = vmatpush1.bf16.msra.mxu0 0
    %487 = vmatprep.subr.bf16.mxu0 0
    %488 = vmatpush1.bf16.msra.mxu0 0
    %489 = vmatprep.mubr.bf16.mxu0 0
    %490 = vmatmul.mubr.bf16.gmra.mrb[0].mxu0 %v452
    %v491 = vpop.f32.mrb[0].mxu0
    %v492 = vadd.f32 0.0, %v491
    %v493 = vpop.f32.mrb[0].mxu0
    %v494 = vpop.f32.mrb[0].mxu0
    %v495 = vadd.f32 0.0, %v494
    %v496 = vpop.f32.mrb[0].mxu0
    %497 = vmatprep.mubr.bf16.mxu0 0
    %498 = vmatmul.mubr.bf16.gmra.mrb[0].mxu0 %v455
    %v499 = vpop.f32.mrb[0].mxu0
    %v500 = vadd.f32 0.0, %v499
    %v501 = vpop.f32.mrb[0].mxu0
    %v502 = vpop.f32.mrb[0].mxu0
    %v503 = vadd.f32 0.0, %v502
    %v504 = vpop.f32.mrb[0].mxu0
    %505 = vdwg.mxu0
    %v506 = vadd.f32 %v402, %v492
    %v507 = vadd.f32 %v405, %v495
    %v508 = vadd.f32 %v410, %v500
    %v509 = vadd.f32 %v413, %v503
    %v510 = vmax.f32 %v506, 0.0
    %v511 = vmax.f32 %v507, 0.0
    %v512 = vmax.f32 %v508, 0.0
    %v513 = vmax.f32 %v509, 0.0
    %v514 = vpack.c.bf16 %v511, %v510
    %v515 = vpack.c.bf16 %v513, %v512
    %v516 = vld [vmem:[%s3] sm:$0xf]
    %v517 = vld [vmem:[%s3 + $0x4] sm:$0xf]
    %v518 = vld [vmem:[%s3 + $0x8] sm:$0xf]
    %v519 = vld [vmem:[%s3 + $0xc] sm:$0xf]
    %v520 = vld [vmem:[%s3 + $0x10] sm:$0xf]
    %v521 = vld [vmem:[%s3 + $0x14] sm:$0xf]
    %v522 = vld [vmem:[%s3 + $0x18] sm:$0xf]
    %v523 = vld [vmem:[%s3 + $0x1c] sm:$0xf]
    %v532 = vunpack.c.l.b16 %v516
    %v533 = vunpack.c.l.b16 %v517
    %v534 = vunpack.c.l.b16 %v518
    %v535 = vunpack.c.l.b16 %v519
    %v536 = vunpack.c.l.b16 %v520
    %v537 = vunpack.c.l.b16 %v521
    %v538 = vunpack.c.l.b16 %v522
    %v539 = vunpack.c.l.b16 %v523
    %v540 = vpack.c.b16 %v533, %v532
    %v541 = vpack.c.b16 %v535, %v534
    %v542 = vpack.c.b16 %v537, %v536
    %v543 = vpack.c.b16 %v539, %v538
    %v549 = vsel %vm281, %v514, 0
    %v552 = vsel %vm281, %v515, 0
    %554 = vmatprep.subr.bf16.mxu0 0
    %555 = vmatpush1.bf16.msra.mxu0 %v540
    %556 = vmatprep.subr.bf16.mxu0 0
    %557 = vmatpush1.bf16.msra.mxu0 %v541
    %558 = vmatprep.subr.bf16.mxu0 0
    %559 = vmatpush1.bf16.msra.mxu0 %v542
    %560 = vmatprep.subr.bf16.mxu0 0
    %561 = vmatpush1.bf16.msra.mxu0 %v543
    %562 = vmatprep.subr.bf16.mxu0 0
    %563 = vmatpush1.bf16.msra.mxu0 0
    %564 = vmatprep.subr.bf16.mxu0 0
    %565 = vmatpush1.bf16.msra.mxu0 0
    %566 = vmatprep.subr.bf16.mxu0 0
    %567 = vmatpush1.bf16.msra.mxu0 0
    %568 = vmatprep.subr.bf16.mxu0 0
    %569 = vmatpush1.bf16.msra.mxu0 0
    %570 = vmatprep.subr.bf16.mxu0 0
    %571 = vmatpush1.bf16.msra.mxu0 0
    %572 = vmatprep.subr.bf16.mxu0 0
    %573 = vmatpush1.bf16.msra.mxu0 0
    %574 = vmatprep.subr.bf16.mxu0 0
    %575 = vmatpush1.bf16.msra.mxu0 0
    %576 = vmatprep.subr.bf16.mxu0 0
    %577 = vmatpush1.bf16.msra.mxu0 0
    %578 = vmatprep.subr.bf16.mxu0 0
    %579 = vmatpush1.bf16.msra.mxu0 0
    %580 = vmatprep.subr.bf16.mxu0 0
    %581 = vmatpush1.bf16.msra.mxu0 0
    %582 = vmatprep.subr.bf16.mxu0 0
    %583 = vmatpush1.bf16.msra.mxu0 0
    %584 = vmatprep.subr.bf16.mxu0 0
    %585 = vmatpush1.bf16.msra.mxu0 0
    %586 = vmatprep.mubr.bf16.mxu0 0
    %587 = vmatmul.mubr.bf16.gmra.mrb[0].mxu0 %v549
    %v588 = vpop.f32.mrb[0].mxu0
    %v589 = vadd.f32 %v25, %v588
    %v590 = vpop.f32.mrb[0].mxu0
    %v591 = vpop.f32.mrb[0].mxu0
    %v592 = vadd.f32 %v26, %v591
    %v593 = vpop.f32.mrb[0].mxu0
    %594 = vmatprep.mubr.bf16.mxu0 0
    %595 = vmatmul.mubr.bf16.gmra.mrb[0].mxu0 %v552
    %v596 = vpop.f32.mrb[0].mxu0
    %v597 = vadd.f32 %v27, %v596
    %v598 = vpop.f32.mrb[0].mxu0
    %v599 = vpop.f32.mrb[0].mxu0
    %v600 = vadd.f32 %v28, %v599
    %v601 = vpop.f32.mrb[0].mxu0
    %602 = vdwg.mxu0
    %603 = vst [vmem:[#allocation2] sm:$0xff] %v589
    %604 = vst [vmem:[#allocation2 + $0x8] sm:$0xff] %v592
    %605 = vst [vmem:[#allocation2 + $0x10] sm:$0xff] %v597
    %606 = vst [vmem:[#allocation2 + $0x18] sm:$0xff] %v600
    // Predicated region
    $region26: #{tpu_custom_call.1} parent=1 // pred_check
      _
    $region27: #{tpu_custom_call.1} parent=1 // pred_check_branch
      %608 = sbr.rel (0) target = $region29
    $region28: #{tpu_custom_call.1} parent=1 // pred_region
      %s610 = ssub.s32 512, 512
      %611 = vsyncadd [#allocation3], %s610
      %s612 = sshll.u32 [#allocation2], 4
      %s613 = int_to_ptr.vmem [resolvable:$true] %s612
      %618 = dma.vmem_to_hbm [thread:$0]  %s613, 512, %s6, [#allocation3], 128, 128, 8
    $region29: #{tpu_custom_call.1} parent=1 // pred_fallthru
      _
    // Predicated region
    $region30: #{tpu_custom_call.1} parent=1 // pred_check
      _
    $region31: #{tpu_custom_call.1} parent=1 // pred_check_branch
      %620 = sbr.rel (0) target = $region33
    $region32: #{tpu_custom_call.1} parent=1 // pred_region
      %621 = dma.done [#allocation3], 512
    $region33: #{tpu_custom_call.1} parent=1 // pred_fallthru
      _
    %622 = vsyncpa [#allocation3], 1

</llo_original>
